<compile_context>
chip_gen: v7x
topology: tpu7x:2x2x1
jax: 0.10.0
libtpu: 0.0.40
codegen_flags: <defaults>
</compile_context>

<pallas_src>
import jax
import jax.numpy as jnp
from jax.experimental import pallas as pl
from jax.experimental.pallas import tpu as pltpu


def _round_up(a, m):
    return (a + m - 1) // m * m


def _vmem_ceiling():
    """~78% of physical VMEM (v5e/v6e: ~100 MiB, v7x: ~50 MiB). Conservative 64 MiB fallback."""
    cap = 64 << 20
    try:
        info = pltpu.get_tpu_info()
        cap = int(getattr(info, "vmem_capacity_bytes", cap))
    except Exception:
        pass
    return max(32 << 20, int(cap * 0.78))


def _gin_vmem_est(tm, tk, Np, Hp, Cp, G, resident):
    """Conservative VMEM estimate for one GIN-layer pallas_call (double-buffered blocks)."""
    adj = 2 * tm * tk * 2                                    # bf16 adj tiles
    h_in = (2 * Np * Hp * 2) if resident else (2 * tk * Hp * 2)  # bf16 h carry
    pool = 2 * G * tm * 4
    wts = 2 * (2 * Hp * Hp + Hp * Cp + 6 * Hp) * 4
    h_out = 2 * tm * Hp * 2                                  # bf16 new h carry
    part = 2 * G * Cp * 4
    acc = tm * Hp * 4                                        # f32 accumulator scratch
    epi = 3 * tm * Hp * 4                                    # epilogue f32 temps (agg/t/h_new)
    return adj + h_in + pool + wts + h_out + part + acc + epi


def _plan_tiles(N, Hp, Cp, G, ceiling, tm_max=512, tk_max=2048):
    """Pick (tm, tk, Np, resident) so that: tm | tk | Np (padding only to one tm tile),
    ni >= 2 when the graph allows it (v7x megacore), and the VMEM estimate fits `ceiling`.
    Prefer a fully VMEM-resident h carry with the largest fitting tk."""
    n128 = _round_up(N, 128)
    tm = min(tm_max, n128)
    if n128 >= 256:  # keep the parallel row-tile axis splittable across 2 TCs (v7x)
        tm = min(tm, max(128, (n128 // 2) // 128 * 128))
    while True:
        Np = _round_up(N, tm)
        r = Np // tm
        divs = [d for d in range(r, 0, -1) if r % d == 0]
        for resident in (True, False):
            for d in divs:
                tk = d * tm
                if tk > tk_max:
                    continue
                est = _gin_vmem_est(tm, tk, Np, Hp, Cp, G, resident)
                if est <= ceiling:
                    return tm, tk, Np, resident, est
        if tm == 128:
            Np = _round_up(N, 128)
            return 128, 128, Np, False, _gin_vmem_est(128, 128, Np, Hp, Cp, G, False)
        tm = max(128, tm // 2)


# --------------------------------------------------------------------------------------
# Kernels
# --------------------------------------------------------------------------------------
def lin_in_kernel(x_ref, w_ref, b_ref, h_ref):
    h = jnp.dot(x_ref[...], w_ref[...], preferred_element_type=jnp.float32) + b_ref[...]
    h_ref[...] = h.astype(h_ref.dtype)


def make_gin_layer_kernel(resident, tk):
    """One GIN layer for one node-row tile, reduced over node-column tiles k.

    grid = (ni, nk): i = node-row tile ("parallel"), k = reduction tile ("arbitrary", last).
    If `resident`, the full (Np, Hp) bf16 h carry lives in VMEM and is sliced with pl.ds;
    otherwise h arrives as a (tk, Hp) streamed tile.
    """
    def kernel(adj_ref, h_ref, pool_ref,
               w1_ref, b1_ref, s1_ref, t1_ref,
               w2_ref, b2_ref, s2_ref, t2_ref,
               wjk_ref,
               h_out_ref, part_ref,
               acc_ref):
        k = pl.program_id(1)

        @pl.when(k == 0)
        def _():
            acc_ref[...] = jnp.zeros_like(acc_ref)

        if resident:
            off = pl.multiple_of(k * tk, tk)
            h_tile = h_ref[pl.ds(off, tk), :]
        else:
            h_tile = h_ref[...]

        # GINConv aggregation: (1+eps)*x + sum of neighbor features == adj_plus @ h.
        # Native bf16 x bf16 MXU matmul, f32 accumulation (no in-kernel f32 cast of adj).
        acc_ref[...] += jnp.dot(adj_ref[...], h_tile, preferred_element_type=jnp.float32)

        @pl.when(k == pl.num_programs(1) - 1)
        def _():
            agg = acc_ref[...]                                          # (TM, Hp) f32
            # GIN MLP: Linear -> BN(eval, folded) -> ReLU -> Linear
            t = jnp.dot(agg, w1_ref[...], preferred_element_type=jnp.float32) + b1_ref[...]
            t = jnp.maximum(t * s1_ref[...] + t1_ref[...], 0.0)
            t = jnp.dot(t, w2_ref[...], preferred_element_type=jnp.float32) + b2_ref[...]
            # outer BatchNorm1d (eval, folded) + ReLU (dropout = identity in eval mode)
            h_new = jnp.maximum(t * s2_ref[...] + t2_ref[...], 0.0)
            h_out_ref[...] = h_new.astype(h_out_ref.dtype)              # bf16 carry
            # Fused JK-'cat' + mean-pool + jk_lin contribution of this row tile / layer:
            #   pool(cat(h_1..h_L)) @ W_cat == sum_l sum_i (pool[:, rows_i] @ h_l[rows_i]) @ W_l
            pooled = jnp.dot(pool_ref[...], h_new, preferred_element_type=jnp.float32)  # (G, Hp)
            part_ref[...] = jnp.dot(pooled, wjk_ref[...],
                                    preferred_element_type=jnp.float32)[None]           # (1,G,Cp)

    return kernel


# --------------------------------------------------------------------------------------
# Wrapper
# --------------------------------------------------------------------------------------
def jk_gnn_forward(x, adj_plus, pool_mat, params):
    N, F_in = x.shape
    G = pool_mat.shape[0]
    L, H, _ = params["mlp1_w"].shape
    C = params["wjk"].shape[-1]
    f32 = jnp.float32
    bf16 = jnp.bfloat16

    # ---- lane-dense feature padding (multiples of 128) ----
    Hp = _round_up(H, 128)
    Cp = _round_up(C, 128)
    Fp = _round_up(F_in, 128)

    # ---- generation-aware tiling / VMEM budget ----
    ceiling = _vmem_ceiling()
    tm, tk, Np, resident, gin_est = _plan_tiles(N, Hp, Cp, G, ceiling)
    ni, nk = Np // tm, Np // tk

    lin_est = (2 * tm * Fp * 4 + 2 * Fp * Hp * 4 + 2 * Hp * 4
               + 2 * tm * Hp * 2 + tm * Hp * 4)
    vmem_limit = int(min(max(int(1.5 * max(gin_est, lin_est)), 32 << 20), ceiling))

    # ---- pad node-dim inputs; adjacency streamed as bf16 (edge counts exact in bf16) ----
    xp = jnp.pad(x, ((0, Np - N), (0, Fp - F_in))).astype(f32)
    adj_p = jnp.pad(adj_plus, ((0, Np - N), (0, Np - N))).astype(bf16)
    pool_p = jnp.pad(pool_mat, ((0, 0), (0, Np - N))).astype(f32)

    def pad2(a, r, c):
        return jnp.pad(a, ((0, r - a.shape[0]), (0, c - a.shape[1])))

    w_in = pad2(params["w_in"], Fp, Hp)
    b_in = pad2(params["b_in"], 1, Hp)

    # ---- lin_in: h0 = x @ W_in + b_in, tiled over node rows; bf16 carry ----
    h = pl.pallas_call(
        lin_in_kernel,
        out_shape=jax.ShapeDtypeStruct((Np, Hp), bf16),
        grid_spec=pltpu.PrefetchScalarGridSpec(
            num_scalar_prefetch=0,
            grid=(ni,),
            in_specs=[
                pl.BlockSpec((tm, Fp), lambda i: (i, 0)),
                pl.BlockSpec((Fp, Hp), lambda i: (0, 0)),
                pl.BlockSpec((1, Hp), lambda i: (0, 0)),
            ],
            out_specs=pl.BlockSpec((tm, Hp), lambda i: (i, 0)),
        ),
        compiler_params=pltpu.CompilerParams(
            dimension_semantics=("parallel",), vmem_limit_bytes=vmem_limit),
    )(xp, w_in, b_in)

    gin_kernel = make_gin_layer_kernel(resident, tk)
    if resident:
        # Whole bf16 h carry lives in VMEM for the layer (fetched once; constant block idx).
        h_spec = pl.BlockSpec((Np, Hp), lambda i, k: (0, 0))
    else:
        h_spec = pl.BlockSpec((tk, Hp), lambda i, k: (k, 0))

    # ---- GIN layers (sequential carry through HBM; each layer is one tiled pallas_call) ----
    parts = []
    for l in range(L):
        w1 = pad2(params["mlp1_w"][l], Hp, Hp)
        b1 = pad2(params["mlp1_b"][l], 1, Hp)
        s1 = pad2(params["bnm_s"][l], 1, Hp)
        t1 = pad2(params["bnm_t"][l], 1, Hp)
        w2 = pad2(params["mlp2_w"][l], Hp, Hp)
        b2 = pad2(params["mlp2_b"][l], 1, Hp)
        s2 = pad2(params["bn_s"][l], 1, Hp)
        t2 = pad2(params["bn_t"][l], 1, Hp)
        wjk = pad2(params["wjk"][l], Hp, Cp)

        h, part = pl.pallas_call(
            gin_kernel,
            out_shape=(jax.ShapeDtypeStruct((Np, Hp), bf16),
                       jax.ShapeDtypeStruct((ni, G, Cp), f32)),
            grid_spec=pltpu.PrefetchScalarGridSpec(
                num_scalar_prefetch=0,
                grid=(ni, nk),                                    # reduction axis last
                in_specs=[
                    pl.BlockSpec((tm, tk), lambda i, k: (i, k)),  # adj tile (bf16, streamed)
                    h_spec,                                       # bf16 h carry (resident/tiled)
                    pl.BlockSpec((G, tm), lambda i, k: (0, i)),   # pool columns of this tile
                    pl.BlockSpec((Hp, Hp), lambda i, k: (0, 0)),  # mlp1 W
                    pl.BlockSpec((1, Hp), lambda i, k: (0, 0)),   # mlp1 b
                    pl.BlockSpec((1, Hp), lambda i, k: (0, 0)),   # folded BN(mlp) scale
                    pl.BlockSpec((1, Hp), lambda i, k: (0, 0)),   # folded BN(mlp) shift
                    pl.BlockSpec((Hp, Hp), lambda i, k: (0, 0)),  # mlp2 W
                    pl.BlockSpec((1, Hp), lambda i, k: (0, 0)),   # mlp2 b
                    pl.BlockSpec((1, Hp), lambda i, k: (0, 0)),   # folded outer BN scale
                    pl.BlockSpec((1, Hp), lambda i, k: (0, 0)),   # folded outer BN shift
                    pl.BlockSpec((Hp, Cp), lambda i, k: (0, 0)),  # jk_lin slice for layer l
                ],
                out_specs=(
                    pl.BlockSpec((tm, Hp), lambda i, k: (i, 0)),       # new bf16 h carry
                    pl.BlockSpec((1, G, Cp), lambda i, k: (i, 0, 0)),  # partial logits
                ),
                scratch_shapes=[pltpu.VMEM((tm, Hp), f32)],            # f32 agg accumulator
            ),
            compiler_params=pltpu.CompilerParams(
                dimension_semantics=("parallel", "arbitrary"),
                vmem_limit_bytes=vmem_limit),
        )(adj_p, h, pool_p, w1, b1, s1, t1, w2, b2, s2, t2, wjk)
        parts.append(part)

    # Tiny (G, Cp) reduction over row tiles / layers + bias; slice off class padding.
    logits = sum(p.sum(axis=0) for p in parts)
    return logits[:, :C] + params["bjk"]


# --------------------------------------------------------------------------------------
# Pure-JAX reference (mirrors the PyTorch forward, eval mode) and parameter construction
# --------------------------------------------------------------------------------------
def reference(x, adj_plus, pool_mat, p):
    h = x @ p["w_in"] + p["b_in"]
    L = p["mlp1_w"].shape[0]
    outs = []
    for l in range(L):
        agg = adj_plus @ h
        t = agg @ p["mlp1_w"][l] + p["mlp1_b"][l]
        t = t * p["bnm_s"][l] + p["bnm_t"][l]
        t = jnp.maximum(t, 0.0)
        t = t @ p["mlp2_w"][l] + p["mlp2_b"][l]
        h = t * p["bn_s"][l] + p["bn_t"][l]
        h = jnp.maximum(h, 0.0)
        outs.append(h)
    xcat = jnp.concatenate(outs, axis=-1)                                 # JK 'cat'
    pooled = pool_mat @ xcat                                              # global_mean_pool
    w_cat = jnp.concatenate([p["wjk"][l] for l in range(L)], axis=0)      # (H*L, C)
    return pooled @ w_cat + p["bjk"]                                      # jk_lin


def make_params(key, f_in, hidden, n_layers, n_classes):
    ks = jax.random.split(key, 16)
    eps_bn = 1e-5

    def lin(k, fan_in, fan_out):
        return 0.1 * jax.random.normal(k, (fan_in, fan_out), jnp.float32)

    def bn_fold(kg, kb, km, kv, shape):
        gamma = 1.0 + 0.1 * jax.random.normal(kg, shape, jnp.float32)
        beta = 0.1 * jax.random.normal(kb, shape, jnp.float32)
        mean = 0.1 * jax.random.normal(km, shape, jnp.float32)
        var = 0.5 + jax.random.uniform(kv, shape, jnp.float32)
        scale = gamma * jax.lax.rsqrt(var + eps_bn)
        shift = beta - mean * scale
        return scale, shift

    p = {}
    p["w_in"] = lin(ks[0], f_in, hidden)
    p["b_in"] = 0.1 * jax.random.normal(ks[1], (1, hidden), jnp.float32)
    p["mlp1_w"] = 0.1 * jax.random.normal(ks[2], (n_layers, hidden, hidden), jnp.float32)
    p["mlp1_b"] = 0.1 * jax.random.normal(ks[3], (n_layers, 1, hidden), jnp.float32)
    p["mlp2_w"] = 0.1 * jax.random.normal(ks[4], (n_layers, hidden, hidden), jnp.float32)
    p["mlp2_b"] = 0.1 * jax.random.normal(ks[5], (n_layers, 1, hidden), jnp.float32)
    p["bnm_s"], p["bnm_t"] = bn_fold(ks[6], ks[7], ks[8], ks[9], (n_layers, 1, hidden))
    p["bn_s"], p["bn_t"] = bn_fold(ks[10], ks[11], ks[12], ks[13], (n_layers, 1, hidden))
    # jk_lin: Linear(hidden * n_layers, n_classes); stored as (L, H, C) slices of the
    # transposed weight so the kernel can accumulate per-layer contributions.
    p["wjk"] = 0.1 * jax.random.normal(ks[14], (n_layers, hidden, n_classes), jnp.float32)
    p["bjk"] = 0.1 * jax.random.normal(ks[15], (1, n_classes), jnp.float32)
    return p


if __name__ == "__main__":
    # Small synthetic graph batch: N nodes total, 2 graphs, GIN with 2 layers.
    N, F_IN, HIDDEN, N_LAYERS, N_CLASSES, N_GRAPHS, E = 16, 8, 32, 2, 3, 2, 40

    key = jax.random.PRNGKey(0)
    k_x, k_src, k_dst, k_p = jax.random.split(key, 4)

    x = jax.random.normal(k_x, (N, F_IN), jnp.float32)
    src = jax.random.randint(k_src, (E,), 0, N)
    dst = jax.random.randint(k_dst, (E,), 0, N)
    batch = jnp.concatenate([jnp.zeros(N // 2, jnp.int32), jnp.ones(N - N // 2, jnp.int32)])

    # Dense GIN aggregation operator: adj_plus[i, j] = #edges j->i (+ (1+eps) on diag, eps=0)
    adj = jnp.zeros((N, N), jnp.float32).at[dst, src].add(1.0)
    adj_plus = adj + jnp.eye(N, dtype=jnp.float32)

    # global_mean_pool as a (G, N) matrix
    onehot = (batch[None, :] == jnp.arange(N_GRAPHS)[:, None]).astype(jnp.float32)
    pool_mat = onehot / onehot.sum(axis=1, keepdims=True)

    params = make_params(k_p, F_IN, HIDDEN, N_LAYERS, N_CLASSES)

    out = jk_gnn_forward(x, adj_plus, pool_mat, params)
    out = jax.block_until_ready(out)

    ref = reference(x, adj_plus, pool_mat, params)
    assert out.shape == (N_GRAPHS, N_CLASSES)
    # bf16 adjacency / bf16 h carry -> tolerance loosened vs the all-f32 reference.
    assert jnp.allclose(out, ref, atol=5e-2, rtol=5e-2), (out, ref)
    print("KERNEL_OK")
</pallas_src>

<mosaic_0001>
module attributes {stable_mosaic.version = 11 : i64} {
  func.func @lin_in_kernel(%arg0: i32, %arg1: memref<128x128xf32, #tpu.memory_space<vmem>>, %arg2: memref<128x128xf32, #tpu.memory_space<vmem>>, %arg3: memref<1x128xf32, #tpu.memory_space<vmem>>, %arg4: memref<128x128xbf16, #tpu.memory_space<vmem>>) attributes {dimension_semantics = [#tpu.dimension_semantics<parallel>], iteration_bounds = array<i64: 1>, scalar_prefetch = 0 : i64, scratch_operands = 0 : i64, tpu.core_type = #tpu.core_type<tc>, window_params = [{transform_indices = @transform_0, window_bounds = array<i64: 128, 128>}, {pipeline_mode = #tpu.pipeline_mode<synchronous>, transform_indices = @transform_1, window_bounds = array<i64: 128, 128>}, {pipeline_mode = #tpu.pipeline_mode<synchronous>, transform_indices = @transform_2, window_bounds = array<i64: 1, 128>}, {transform_indices = @transform_3, window_bounds = array<i64: 128, 128>}]} {
    %c0 = arith.constant 0 : index
    %c0_0 = arith.constant 0 : index
    %0 = vector.load %arg1[%c0, %c0_0] : memref<128x128xf32, #tpu.memory_space<vmem>>, vector<128x128xf32>
    %c0_1 = arith.constant 0 : index
    %c0_2 = arith.constant 0 : index
    %1 = vector.load %arg2[%c0_1, %c0_2] : memref<128x128xf32, #tpu.memory_space<vmem>>, vector<128x128xf32>
    %cst = arith.constant dense<0.000000e+00> : vector<128x128xf32>
    %2 = tpu.matmul %0, %1, %cst {dimension_numbers = #tpu.dot_dimension_numbers<[1], [0], [0], [1], [0, 0, 1, 1], [], []>} : vector<128x128xf32>, vector<128x128xf32>, vector<128x128xf32> -> vector<128x128xf32>
    %c0_3 = arith.constant 0 : index
    %c0_4 = arith.constant 0 : index
    %3 = vector.load %arg3[%c0_3, %c0_4] : memref<1x128xf32, #tpu.memory_space<vmem>>, vector<1x128xf32>
    %4 = vector.broadcast %3 : vector<1x128xf32> to vector<128x128xf32>
    %5 = arith.addf %2, %4 : vector<128x128xf32>
    %6 = arith.truncf %5 : vector<128x128xf32> to vector<128x128xbf16>
    %c0_5 = arith.constant 0 : index
    %c0_6 = arith.constant 0 : index
    %7 = vector.load %arg4[%c0_5, %c0_6] : memref<128x128xbf16, #tpu.memory_space<vmem>>, vector<128x128xbf16>
    tpu.vector_store %arg4[%c0_5, %c0_6], %6 {strides = array<i32>} : memref<128x128xbf16, #tpu.memory_space<vmem>>, vector<128x128xbf16>,
    return
  }
  func.func @transform_0(%arg0: i32) -> (i32, i32) {
    %c0_i32 = arith.constant 0 : i32
    %c0_i32_0 = arith.constant 0 : i32
    return %arg0, %c0_i32 : i32, i32
  }
  func.func @transform_1(%arg0: i32) -> (i32, i32) {
    %c0_i32 = arith.constant 0 : i32
    %c0_i32_0 = arith.constant 0 : i32
    %c0_i32_1 = arith.constant 0 : i32
    return %c0_i32, %c0_i32_0 : i32, i32
  }
  func.func @transform_2(%arg0: i32) -> (i32, i32) {
    %c0_i32 = arith.constant 0 : i32
    %c0_i32_0 = arith.constant 0 : i32
    %c0_i32_1 = arith.constant 0 : i32
    return %c0_i32, %c0_i32_0 : i32, i32
  }
  func.func @transform_3(%arg0: i32) -> (i32, i32) {
    %c0_i32 = arith.constant 0 : i32
    %c0_i32_0 = arith.constant 0 : i32
    return %arg0, %c0_i32 : i32, i32
  }
}

</mosaic_0001>

<llo_original>
// kernel: tpu_custom_call.1
$region0: #{tpu_custom_call.1}
  #allocation0 [shape = 'u32[]', space=smem, size = 0x4, offset = 0x4, fixed_abs, tag = 'smem constant byte address 0x4 - core index']
  #allocation1 [shape = 'u32[144,128]{1,0:T(1,128)}', space=vmem, size = 0x12000, scoped, tag = 'internal scratch']
  %s0 = inlined_call_operand.hbm [shape: f32[128,128], index: 0, kind: input, shape index: {}]
  %s1 = inlined_call_operand.hbm [shape: f32[128,128], index: 1, kind: input, shape index: {}]
  %s2 = inlined_call_operand.vmem [shape: f32[1,128], index: 2, kind: input, shape index: {}]
  %s3 = inlined_call_operand.hbm [shape: bf16[128,128], index: 3, kind: output, shape index: {}]
  %s4 = sld [smem:[#allocation0]]
  $region30: #{tpu_custom_call.1} parent=0
    _
  %s6 = ssub.s32 1, %s4
  %s7 = scalar_select 0, %s6, %s4
  $region1: #{tpu_custom_call.1} parent=0
    #allocation2 [shape = 'u8[65536]{0}', space=vmem, size = 0x10000, scoped, tag = 'input window, operand 0, single buffered']
    #allocation3 [shape = 's32[1]{0}', space=sflag, size = 0x4, scoped, tag = 'scoped memory for tpu_custom_call.1']
    #allocation4 [shape = 's32[1]{0}', space=sflag, size = 0x4, scoped, tag = 'scoped memory for tpu_custom_call.1']
    #allocation5 [shape = 'u8[65536]{0}', space=vmem, size = 0x10000, scoped, tag = 'input window, operand 1, single buffered']
    #allocation6 [shape = 's32[1]{0}', space=sflag, size = 0x4, scoped, tag = 'scoped memory for tpu_custom_call.1']
    #allocation7 [shape = 'u8[32768]{0}', space=vmem, size = 0x8000, scoped, tag = 'output window, operand 0, single buffered']
    %8 = vsyncpa [#allocation3], 0
    %9 = vsyncpa [#allocation6], 0
    %10 = vsyncpa [#allocation4], 0
    // Predicated region
    $region2: #{tpu_custom_call.1} parent=1 // pred_check
      _
    $region3: #{tpu_custom_call.1} parent=1 // pred_check_branch
      %12 = sbr.rel (0) target = $region5
    $region4: #{tpu_custom_call.1} parent=1 // pred_region
      %s14 = ssub.s32 2048, 2048
      %15 = vsyncadd [#allocation3], %s14
      %s16 = sshll.u32 [#allocation2], 4
      %s17 = int_to_ptr.vmem [resolvable:$true] %s16
      %22 = dma.hbm_to_vmem [thread:$0]  %s0, 2048, %s17, [#allocation3], 128, 128, 8
    $region5: #{tpu_custom_call.1} parent=1 // pred_fallthru
      _
    // Predicated region
    $region6: #{tpu_custom_call.1} parent=1 // pred_check
      _
    $region7: #{tpu_custom_call.1} parent=1 // pred_check_branch
      %24 = sbr.rel (0) target = $region9
    $region8: #{tpu_custom_call.1} parent=1 // pred_region
      %s26 = ssub.s32 2048, 2048
      %27 = vsyncadd [#allocation6], %s26
      %s28 = sshll.u32 [#allocation5], 4
      %s29 = int_to_ptr.vmem [resolvable:$true] %s28
      %34 = dma.hbm_to_vmem [thread:$0]  %s1, 2048, %s29, [#allocation6], 128, 128, 8
    $region9: #{tpu_custom_call.1} parent=1 // pred_fallthru
      _
    // Predicated region
    $region10: #{tpu_custom_call.1} parent=1 // pred_check
      _
    $region11: #{tpu_custom_call.1} parent=1 // pred_check_branch
      %36 = sbr.rel (0) target = $region13
    $region12: #{tpu_custom_call.1} parent=1 // pred_region
      _
    $region13: #{tpu_custom_call.1} parent=1 // pred_fallthru
      _
    // Predicated region
    $region14: #{tpu_custom_call.1} parent=1 // pred_check
      _
    $region15: #{tpu_custom_call.1} parent=1 // pred_check_branch
      %38 = sbr.rel (0) target = $region17
    $region16: #{tpu_custom_call.1} parent=1 // pred_region
      %39 = dma.done [#allocation3], 2048
    $region17: #{tpu_custom_call.1} parent=1 // pred_fallthru
      _
    // Predicated region
    $region18: #{tpu_custom_call.1} parent=1 // pred_check
      _
    $region19: #{tpu_custom_call.1} parent=1 // pred_check_branch
      %41 = sbr.rel (0) target = $region21
    $region20: #{tpu_custom_call.1} parent=1 // pred_region
      %42 = dma.done [#allocation6], 2048
    $region21: #{tpu_custom_call.1} parent=1 // pred_fallthru
      _
    %v43 = vld [vmem:[#allocation2] sm:$0xff]
    %v44 = vld [vmem:[#allocation2 + $0x8] sm:$0xff]
    %v45 = vld [vmem:[#allocation2 + $0x10] sm:$0xff]
    %v46 = vld [vmem:[#allocation2 + $0x18] sm:$0xff]
    %v47 = vld [vmem:[#allocation2 + $0x20] sm:$0xff]
    %v48 = vld [vmem:[#allocation2 + $0x28] sm:$0xff]
    %v49 = vld [vmem:[#allocation2 + $0x30] sm:$0xff]
    %v50 = vld [vmem:[#allocation2 + $0x38] sm:$0xff]
    %v51 = vld [vmem:[#allocation2 + $0x40] sm:$0xff]
    %v52 = vld [vmem:[#allocation2 + $0x48] sm:$0xff]
    %v53 = vld [vmem:[#allocation2 + $0x50] sm:$0xff]
    %v54 = vld [vmem:[#allocation2 + $0x58] sm:$0xff]
    %v55 = vld [vmem:[#allocation2 + $0x60] sm:$0xff]
    %v56 = vld [vmem:[#allocation2 + $0x68] sm:$0xff]
    %v57 = vld [vmem:[#allocation2 + $0x70] sm:$0xff]
    %v58 = vld [vmem:[#allocation2 + $0x78] sm:$0xff]
    %v59 = vld [vmem:[#allocation5] sm:$0xff]
    %v60 = vld [vmem:[#allocation5 + $0x8] sm:$0xff]
    %v61 = vld [vmem:[#allocation5 + $0x10] sm:$0xff]
    %v62 = vld [vmem:[#allocation5 + $0x18] sm:$0xff]
    %v63 = vld [vmem:[#allocation5 + $0x20] sm:$0xff]
    %v64 = vld [vmem:[#allocation5 + $0x28] sm:$0xff]
    %v65 = vld [vmem:[#allocation5 + $0x30] sm:$0xff]
    %v66 = vld [vmem:[#allocation5 + $0x38] sm:$0xff]
    %v67 = vld [vmem:[#allocation5 + $0x40] sm:$0xff]
    %v68 = vld [vmem:[#allocation5 + $0x48] sm:$0xff]
    %v69 = vld [vmem:[#allocation5 + $0x50] sm:$0xff]
    %v70 = vld [vmem:[#allocation5 + $0x58] sm:$0xff]
    %v71 = vld [vmem:[#allocation5 + $0x60] sm:$0xff]
    %v72 = vld [vmem:[#allocation5 + $0x68] sm:$0xff]
    %v73 = vld [vmem:[#allocation5 + $0x70] sm:$0xff]
    %v74 = vld [vmem:[#allocation5 + $0x78] sm:$0xff]
    %v75 = vld [vmem:[%s2] sm:$0x1]
    %v77 = vlaneseq
    %v78 = vshrl.u32 %v77, 7
    %v79 = vsub.s32 0, %v78
    %v80 = vrot.slane %v75, %v79
    %82 = vmatprep.subr.mxu0 0.0
    %83 = vmatpush1.msra.mxu0 %v59
    %84 = vmatprep.subr.mxu0 0.0
    %85 = vmatpush1.msra.mxu0 %v60
    %86 = vmatprep.subr.mxu0 0.0
    %87 = vmatpush1.msra.mxu0 %v61
    %88 = vmatprep.subr.mxu0 0.0
    %89 = vmatpush1.msra.mxu0 %v62
    %90 = vmatprep.subr.mxu0 0.0
    %91 = vmatpush1.msra.mxu0 %v63
    %92 = vmatprep.subr.mxu0 0.0
    %93 = vmatpush1.msra.mxu0 %v64
    %94 = vmatprep.subr.mxu0 0.0
    %95 = vmatpush1.msra.mxu0 %v65
    %96 = vmatprep.subr.mxu0 0.0
    %97 = vmatpush1.msra.mxu0 %v66
    %98 = vmatprep.subr.mxu0 0.0
    %99 = vmatpush1.msra.mxu0 %v67
    %100 = vmatprep.subr.mxu0 0.0
    %101 = vmatpush1.msra.mxu0 %v68
    %102 = vmatprep.subr.mxu0 0.0
    %103 = vmatpush1.msra.mxu0 %v69
    %104 = vmatprep.subr.mxu0 0.0
    %105 = vmatpush1.msra.mxu0 %v70
    %106 = vmatprep.subr.mxu0 0.0
    %107 = vmatpush1.msra.mxu0 %v71
    %108 = vmatprep.subr.mxu0 0.0
    %109 = vmatpush1.msra.mxu0 %v72
    %110 = vmatprep.subr.mxu0 0.0
    %111 = vmatpush1.msra.mxu0 %v73
    %112 = vmatprep.subr.mxu0 0.0
    %113 = vmatpush1.msra.mxu0 %v74
    %114 = vmatprep.subr.mxu0 0.0
    %115 = vmatpush1.msra.mxu0 0.0
    %116 = vmatprep.subr.mxu0 0.0
    %117 = vmatpush1.msra.mxu0 0.0
    %118 = vmatprep.subr.mxu0 0.0
    %119 = vmatpush1.msra.mxu0 0.0
    %120 = vmatprep.subr.mxu0 0.0
    %121 = vmatpush1.msra.mxu0 0.0
    %122 = vmatprep.subr.mxu0 0.0
    %123 = vmatpush1.msra.mxu0 0.0
    %124 = vmatprep.subr.mxu0 0.0
    %125 = vmatpush1.msra.mxu0 0.0
    %126 = vmatprep.subr.mxu0 0.0
    %127 = vmatpush1.msra.mxu0 0.0
    %128 = vmatprep.subr.mxu0 0.0
    %129 = vmatpush1.msra.mxu0 0.0
    %130 = vmatprep.subr.mxu0 0.0
    %131 = vmatpush1.msra.mxu0 0.0
    %132 = vmatprep.subr.mxu0 0.0
    %133 = vmatpush1.msra.mxu0 0.0
    %134 = vmatprep.subr.mxu0 0.0
    %135 = vmatpush1.msra.mxu0 0.0
    %136 = vmatprep.subr.mxu0 0.0
    %137 = vmatpush1.msra.mxu0 0.0
    %138 = vmatprep.subr.mxu0 0.0
    %139 = vmatpush1.msra.mxu0 0.0
    %140 = vmatprep.subr.mxu0 0.0
    %141 = vmatpush1.msra.mxu0 0.0
    %142 = vmatprep.subr.mxu0 0.0
    %143 = vmatpush1.msra.mxu0 0.0
    %144 = vmatprep.subr.mxu0 0.0
    %145 = vmatpush1.msra.mxu0 0.0
    %146 = vmatprep.mubr.f32.mxu0 0.0
    %147 = vmatmul.mubr.f32.gmra.mrb[0].mxu0 %v43
    %v148 = vpop.f32.mrb[0].mxu0
    %v149 = vadd.f32 %v80, %v148
    %v150 = vpop.f32.mrb[0].mxu0
    %151 = vmatprep.mubr.f32.mxu0 0.0
    %152 = vmatmul.mubr.f32.gmra.mrb[0].mxu0 %v44
    %v153 = vpop.f32.mrb[0].mxu0
    %v154 = vadd.f32 %v80, %v153
    %v155 = vpop.f32.mrb[0].mxu0
    %156 = vmatprep.mubr.f32.mxu0 0.0
    %157 = vmatmul.mubr.f32.gmra.mrb[0].mxu0 %v45
    %v158 = vpop.f32.mrb[0].mxu0
    %v159 = vadd.f32 %v80, %v158
    %v160 = vpop.f32.mrb[0].mxu0
    %161 = vmatprep.mubr.f32.mxu0 0.0
    %162 = vmatmul.mubr.f32.gmra.mrb[0].mxu0 %v46
    %v163 = vpop.f32.mrb[0].mxu0
    %v164 = vadd.f32 %v80, %v163
    %v165 = vpop.f32.mrb[0].mxu0
    %166 = vmatprep.mubr.f32.mxu0 0.0
    %167 = vmatmul.mubr.f32.gmra.mrb[0].mxu0 %v47
    %v168 = vpop.f32.mrb[0].mxu0
    %v169 = vadd.f32 %v80, %v168
    %v170 = vpop.f32.mrb[0].mxu0
    %171 = vmatprep.mubr.f32.mxu0 0.0
    %172 = vmatmul.mubr.f32.gmra.mrb[0].mxu0 %v48
    %v173 = vpop.f32.mrb[0].mxu0
    %v174 = vadd.f32 %v80, %v173
    %v175 = vpop.f32.mrb[0].mxu0
    %176 = vmatprep.mubr.f32.mxu0 0.0
    %177 = vmatmul.mubr.f32.gmra.mrb[0].mxu0 %v49
    %v178 = vpop.f32.mrb[0].mxu0
    %v179 = vadd.f32 %v80, %v178
    %v180 = vpop.f32.mrb[0].mxu0
    %181 = vmatprep.mubr.f32.mxu0 0.0
    %182 = vmatmul.mubr.f32.gmra.mrb[0].mxu0 %v50
    %v183 = vpop.f32.mrb[0].mxu0
    %v184 = vadd.f32 %v80, %v183
    %v185 = vpop.f32.mrb[0].mxu0
    %186 = vmatprep.mubr.f32.mxu0 0.0
    %187 = vmatmul.mubr.f32.gmra.mrb[0].mxu0 %v51
    %v188 = vpop.f32.mrb[0].mxu0
    %v189 = vadd.f32 %v80, %v188
    %v190 = vpop.f32.mrb[0].mxu0
    %191 = vmatprep.mubr.f32.mxu0 0.0
    %192 = vmatmul.mubr.f32.gmra.mrb[0].mxu0 %v52
    %v193 = vpop.f32.mrb[0].mxu0
    %v194 = vadd.f32 %v80, %v193
    %v195 = vpop.f32.mrb[0].mxu0
    %196 = vmatprep.mubr.f32.mxu0 0.0
    %197 = vmatmul.mubr.f32.gmra.mrb[0].mxu0 %v53
    %v198 = vpop.f32.mrb[0].mxu0
    %v199 = vadd.f32 %v80, %v198
    %v200 = vpop.f32.mrb[0].mxu0
    %201 = vmatprep.mubr.f32.mxu0 0.0
    %202 = vmatmul.mubr.f32.gmra.mrb[0].mxu0 %v54
    %v203 = vpop.f32.mrb[0].mxu0
    %v204 = vadd.f32 %v80, %v203
    %v205 = vpop.f32.mrb[0].mxu0
    %206 = vmatprep.mubr.f32.mxu0 0.0
    %207 = vmatmul.mubr.f32.gmra.mrb[0].mxu0 %v55
    %v208 = vpop.f32.mrb[0].mxu0
    %v209 = vadd.f32 %v80, %v208
    %v210 = vpop.f32.mrb[0].mxu0
    %211 = vmatprep.mubr.f32.mxu0 0.0
    %212 = vmatmul.mubr.f32.gmra.mrb[0].mxu0 %v56
    %v213 = vpop.f32.mrb[0].mxu0
    %v214 = vadd.f32 %v80, %v213
    %v215 = vpop.f32.mrb[0].mxu0
    %216 = vmatprep.mubr.f32.mxu0 0.0
    %217 = vmatmul.mubr.f32.gmra.mrb[0].mxu0 %v57
    %v218 = vpop.f32.mrb[0].mxu0
    %v219 = vadd.f32 %v80, %v218
    %v220 = vpop.f32.mrb[0].mxu0
    %221 = vmatprep.mubr.f32.mxu0 0.0
    %222 = vmatmul.mubr.f32.gmra.mrb[0].mxu0 %v58
    %v223 = vpop.f32.mrb[0].mxu0
    %v224 = vadd.f32 %v80, %v223
    %v225 = vpop.f32.mrb[0].mxu0
    %226 = vdwg.mxu0
    %v227 = vpack.c.bf16 %v154, %v149
    %v228 = vpack.c.bf16 %v164, %v159
    %v229 = vpack.c.bf16 %v174, %v169
    %v230 = vpack.c.bf16 %v184, %v179
    %v231 = vpack.c.bf16 %v194, %v189
    %v232 = vpack.c.bf16 %v204, %v199
    %v233 = vpack.c.bf16 %v214, %v209
    %v234 = vpack.c.bf16 %v224, %v219
    %v243 = vunpack.c.l.b16 %v227
    %v244 = vunpack.c.h.b16 %v227
    %v245 = vunpack.c.l.b16 %v228
    %v246 = vunpack.c.h.b16 %v228
    %v247 = vunpack.c.l.b16 %v229
    %v248 = vunpack.c.h.b16 %v229
    %v249 = vunpack.c.l.b16 %v230
    %v250 = vunpack.c.h.b16 %v230
    %v251 = vunpack.c.l.b16 %v231
    %v252 = vunpack.c.h.b16 %v231
    %v253 = vunpack.c.l.b16 %v232
    %v254 = vunpack.c.h.b16 %v232
    %v255 = vunpack.c.l.b16 %v233
    %v256 = vunpack.c.h.b16 %v233
    %v257 = vunpack.c.l.b16 %v234
    %v258 = vunpack.c.h.b16 %v234
    %v259 = vpack.c.b16 %v243, %v243
    %v260 = vpack.c.b16 %v244, %v244
    %v261 = vpack.c.b16 %v245, %v245
    %v262 = vpack.c.b16 %v246, %v246
    %v263 = vpack.c.b16 %v247, %v247
    %v264 = vpack.c.b16 %v248, %v248
    %v265 = vpack.c.b16 %v249, %v249
    %v266 = vpack.c.b16 %v250, %v250
    %v267 = vpack.c.b16 %v251, %v251
    %v268 = vpack.c.b16 %v252, %v252
    %v269 = vpack.c.b16 %v253, %v253
    %v270 = vpack.c.b16 %v254, %v254
    %v271 = vpack.c.b16 %v255, %v255
    %v272 = vpack.c.b16 %v256, %v256
    %v273 = vpack.c.b16 %v257, %v257
    %v274 = vpack.c.b16 %v258, %v258
    %291 = vst [vmem:[#allocation7] sm:$0xf] %v259
    %292 = vst [vmem:[#allocation7 + $0x4] sm:$0xf] %v260
    %293 = vst [vmem:[#allocation7 + $0x8] sm:$0xf] %v261
    %294 = vst [vmem:[#allocation7 + $0xc] sm:$0xf] %v262
    %295 = vst [vmem:[#allocation7 + $0x10] sm:$0xf] %v263
    %296 = vst [vmem:[#allocation7 + $0x14] sm:$0xf] %v264
    %297 = vst [vmem:[#allocation7 + $0x18] sm:$0xf] %v265
    %298 = vst [vmem:[#allocation7 + $0x1c] sm:$0xf] %v266
    %299 = vst [vmem:[#allocation7 + $0x20] sm:$0xf] %v267
    %300 = vst [vmem:[#allocation7 + $0x24] sm:$0xf] %v268
    %301 = vst [vmem:[#allocation7 + $0x28] sm:$0xf] %v269
    %302 = vst [vmem:[#allocation7 + $0x2c] sm:$0xf] %v270
    %303 = vst [vmem:[#allocation7 + $0x30] sm:$0xf] %v271
    %304 = vst [vmem:[#allocation7 + $0x34] sm:$0xf] %v272
    %305 = vst [vmem:[#allocation7 + $0x38] sm:$0xf] %v273
    %306 = vst [vmem:[#allocation7 + $0x3c] sm:$0xf] %v274
    // Predicated region
    $region22: #{tpu_custom_call.1} parent=1 // pred_check
      _
    $region23: #{tpu_custom_call.1} parent=1 // pred_check_branch
      %308 = sbr.rel (0) target = $region25
    $region24: #{tpu_custom_call.1} parent=1 // pred_region
      %s310 = ssub.s32 1024, 1024
      %311 = vsyncadd [#allocation4], %s310
      %s312 = sshll.u32 [#allocation7], 4
      %s313 = int_to_ptr.vmem [resolvable:$true] %s312
      %318 = dma.vmem_to_hbm [thread:$0]  %s313, 1024, %s3, [#allocation4], 64, 64, 4
    $region25: #{tpu_custom_call.1} parent=1 // pred_fallthru
      _
    // Predicated region
    $region26: #{tpu_custom_call.1} parent=1 // pred_check
      _
    $region27: #{tpu_custom_call.1} parent=1 // pred_check_branch
      %320 = sbr.rel (0) target = $region29
    $region28: #{tpu_custom_call.1} parent=1 // pred_region
      %321 = dma.done [#allocation4], 1024
    $region29: #{tpu_custom_call.1} parent=1 // pred_fallthru
      _
    %322 = vsyncpa [#allocation3], 1
    %323 = vsyncpa [#allocation6], 1
    %324 = vsyncpa [#allocation4], 1

</llo_original>
